<compile_context>
chip_gen: v7x
topology: tpu7x:2x2x1
jax: 0.10.0
libtpu: 0.0.40
codegen_flags: <defaults>
</compile_context>

<pallas_src>
import math
import functools

import numpy as np
import jax
import jax.numpy as jnp
from jax.experimental import pallas as pl
from jax.experimental.pallas import tpu as pltpu


# ---------------------------------------------------------------------------
# PE table construction (== PyTorch __init__).  Kept float32 like the buffer.
# ---------------------------------------------------------------------------
def make_positional_encoding(d_model: int, max_len: int = 5000) -> jax.Array:
    position = jnp.arange(max_len, dtype=jnp.float32)[:, None]            # [max_len, 1]
    div_term = jnp.exp(
        jnp.arange(0, d_model, 2, dtype=jnp.float32)
        * (-math.log(10000.0) / d_model)
    )                                                                      # [d_model/2]
    pe = jnp.zeros((max_len, 1, d_model), dtype=jnp.float32)
    pe = pe.at[:, 0, 0::2].set(jnp.sin(position * div_term))
    pe = pe.at[:, 0, 1::2].set(jnp.cos(position * div_term))
    return pe


# ---------------------------------------------------------------------------
# Kernels.  x / mask / out blocks: (tile_s, tile_b*D);  pe block: (tile_s, D).
# The static batch loop replaces the old lane-concat broadcast: each iteration
# is a D-wide, lane-aligned slice read-modify-write, so no full-slab temporary.
# ---------------------------------------------------------------------------
def _pe_add_kernel(x_ref, pe_ref, o_ref, *, batch_tile: int, d_model: int):
    pe = pe_ref[...]                                        # (tile_s, D) float32
    for b in range(batch_tile):
        sl = slice(b * d_model, (b + 1) * d_model)
        y = x_ref[:, sl].astype(jnp.float32) + pe           # f32 add, like PyTorch
        o_ref[:, sl] = y.astype(o_ref.dtype)


def _pe_add_dropout_prng_kernel(seed_ref, x_ref, pe_ref, o_ref, *,
                                batch_tile: int, d_model: int, keep_prob: float):
    # Distinct stream per grid step; deterministic for a given (seed, tiling).
    pltpu.prng_seed(seed_ref[0], pl.program_id(0), pl.program_id(1))
    pe = pe_ref[...]
    # Signed-compare form of a full 32-bit Bernoulli threshold:
    #   P(int32_bits < t) == keep_prob  with  t = keep_prob*2^32 - 2^31.
    # (No 31-bit mask op; bias only from the +/-2^31 clamp, < 2^-32.)
    t = int(round(keep_prob * float(1 << 32))) - (1 << 31)
    t = max(-(1 << 31), min(t, (1 << 31) - 1))
    thresh = jnp.int32(t)
    scale = jnp.float32(1.0 / keep_prob)
    zero = jnp.float32(0.0)
    for b in range(batch_tile):
        sl = slice(b * d_model, (b + 1) * d_model)
        y = x_ref[:, sl].astype(jnp.float32) + pe
        bits = pltpu.bitcast(pltpu.prng_random_bits(y.shape), jnp.int32)
        keep = bits < thresh
        o_ref[:, sl] = (y * jnp.where(keep, scale, zero)).astype(o_ref.dtype)


def _pe_add_dropout_mask_kernel(x_ref, pe_ref, mask_ref, o_ref, *,
                                batch_tile: int, d_model: int):
    # mask_ref holds a pre-scaled float32 keep mask (keep / keep_prob).
    pe = pe_ref[...]
    for b in range(batch_tile):
        sl = slice(b * d_model, (b + 1) * d_model)
        y = x_ref[:, sl].astype(jnp.float32) + pe
        o_ref[:, sl] = (y * mask_ref[:, sl]).astype(o_ref.dtype)


# ---------------------------------------------------------------------------
# Tiling / VMEM budgeting.
# ---------------------------------------------------------------------------
def _vmem_capacity_bytes() -> int:
    try:
        cap = getattr(pltpu.get_tpu_info(), "vmem_capacity_bytes", None)
        if cap:
            return int(cap)
    except Exception:
        pass
    return 64 * 1024 * 1024          # conservative fallback: v7x per-core VMEM


def _choose_tiles(S: int, B: int, D: int, *, stream_bytes_per_elem: int,
                  n_f32_temps: int, budget_bytes: int) -> tuple[int, int]:
    """Pick (tile_s, tile_b) so that double-buffered x/out(/mask) blocks plus
    in-kernel f32/uint32 temporaries fit in `budget_bytes`."""
    def bytes_per_row(tb: int) -> int:
        blocks = 2 * tb * D * stream_bytes_per_elem     # x/out(/mask), double-buffered
        blocks += 2 * D * 4                             # pe block (f32), double-buffered
        temps = n_f32_temps * D * 4                     # per-batch-slice f32/u32 temps
        return blocks + temps

    # If even an 8-row tile with the full batch width blows the budget, block
    # the lane dimension too (second grid axis over batch), keeping divisors.
    tile_b = B
    while tile_b > 1 and 8 * bytes_per_row(tile_b) > budget_bytes:
        tile_b -= 1
        while tile_b > 1 and B % tile_b:
            tile_b -= 1
    if tile_b < B and (tile_b * D) % 128 != 0:
        tile_b = B                      # lane tiles must be 128-aligned; fall back

    rows = budget_bytes // max(bytes_per_row(tile_b), 1)
    if rows >= S:
        return S, tile_b                # full extent: no 8-row multiple needed
    return max(8, (rows // 8) * 8), tile_b


# ---------------------------------------------------------------------------
# Wrapper.
# ---------------------------------------------------------------------------
def positional_encoding_forward(x: jax.Array, pe: jax.Array, *,
                                dropout_p: float = 0.1,
                                training: bool = False,
                                seed: int = 0,
                                use_hw_prng: bool | None = None,
                                core_parallel: bool = False,
                                out_dtype=None) -> jax.Array:
    """x: [seq_len, batch, d_model].  pe: [max_len, 1, d_model] float32 buffer.

    core_parallel=True on v7x (2 TensorCores/chip) shards seq tiles across
    both cores via CORE_PARALLEL; leave False on single-core chips.
    """
    S, B, D = x.shape
    out_dtype = x.dtype if out_dtype is None else np.dtype(out_dtype)
    keep_prob = 1.0 - float(dropout_p)
    apply_dropout = bool(training) and dropout_p > 0.0
    if apply_dropout and keep_prob <= 0.0:
        return jnp.zeros(x.shape, out_dtype)

    if use_hw_prng is None:
        # pltpu.prng_* only lowers on a native TPU backend.
        use_hw_prng = jax.default_backend() == "tpu"
    use_mask = apply_dropout and not use_hw_prng

    # Lane/sublane-dense 2-D views (free reshape: trailing dims merge).
    # NOTE: unmasked lane-dense stores need B*D >= 128 (any real transformer
    # width); smaller widths still run correctly via masked partial stores.
    x2 = x.reshape(S, B * D)
    pe2 = pe[:S, 0, :]                               # (S, D) float32, kept f32 in-kernel
    # TODO(synk): callers invoking this every step can cache pe[:S, 0, :] to
    # skip this small per-call XLA slice.

    in_isz = x.dtype.itemsize
    out_isz = np.dtype(out_dtype).itemsize
    stream_bpe = in_isz + out_isz + (4 if use_mask else 0)

    # Per-chip VMEM budget: v5e/v6e (128 MiB) -> 96 MiB limit; v7x (64 MiB)
    # -> 48 MiB limit, with headroom for Mosaic internal scratch.
    vmem_limit = min((_vmem_capacity_bytes() * 3) // 4, 100 * 1024 * 1024)
    tile_s, tile_b = _choose_tiles(
        S, B, D,
        stream_bytes_per_elem=stream_bpe,
        n_f32_temps=6 if (apply_dropout and use_hw_prng) else 4,
        budget_bytes=vmem_limit // 2)

    n_s = pl.cdiv(S, tile_s)
    n_b = B // tile_b
    grid = (n_s, n_b)
    lane_w = tile_b * D

    seq_sem = pltpu.CORE_PARALLEL if (core_parallel and n_s > 1) else pltpu.PARALLEL
    compiler_params = pltpu.CompilerParams(
        dimension_semantics=(seq_sem, pltpu.PARALLEL),
        vmem_limit_bytes=int(vmem_limit))

    out_shape = jax.ShapeDtypeStruct((S, B * D), out_dtype)
    n_elems = S * B * D

    if not apply_dropout:
        kernel = functools.partial(_pe_add_kernel, batch_tile=tile_b, d_model=D)
        cost = pl.CostEstimate(flops=n_elems, transcendentals=0,
                               bytes_accessed=n_elems * (in_isz + out_isz) + S * D * 4)
        out2 = pl.pallas_call(
            kernel, out_shape=out_shape,
            grid_spec=pltpu.PrefetchScalarGridSpec(
                num_scalar_prefetch=0, grid=grid,
                in_specs=[pl.BlockSpec((tile_s, lane_w), lambda i, j: (i, j)),
                          pl.BlockSpec((tile_s, D), lambda i, j: (i, 0))],
                out_specs=pl.BlockSpec((tile_s, lane_w), lambda i, j: (i, j))),
            compiler_params=compiler_params, cost_estimate=cost,
        )(x2, pe2)
        return out2.reshape(S, B, D)

    if use_hw_prng:
        kernel = functools.partial(_pe_add_dropout_prng_kernel,
                                   batch_tile=tile_b, d_model=D, keep_prob=keep_prob)
        seed_arr = jnp.asarray([seed], dtype=jnp.int32)
        cost = pl.CostEstimate(flops=3 * n_elems, transcendentals=0,
                               bytes_accessed=n_elems * (in_isz + out_isz) + S * D * 4)
        out2 = pl.pallas_call(
            kernel, out_shape=out_shape,
            grid_spec=pltpu.PrefetchScalarGridSpec(
                num_scalar_prefetch=1,               # seed -> SMEM
                grid=grid,
                in_specs=[pl.BlockSpec((tile_s, lane_w), lambda i, j, s: (i, j)),
                          pl.BlockSpec((tile_s, D), lambda i, j, s: (i, 0))],
                out_specs=pl.BlockSpec((tile_s, lane_w), lambda i, j, s: (i, j))),
            compiler_params=compiler_params, cost_estimate=cost,
        )(seed_arr, x2, pe2)
        return out2.reshape(S, B, D)

    # Portable fallback (non-TPU backend / interpret mode): host-generated,
    # pre-scaled float32 Bernoulli keep mask, applied inside the kernel.
    key = jax.random.PRNGKey(seed)
    keep = jax.random.bernoulli(key, p=keep_prob, shape=(S, B * D))
    mask = keep.astype(jnp.float32) * jnp.float32(1.0 / keep_prob)
    kernel = functools.partial(_pe_add_dropout_mask_kernel, batch_tile=tile_b, d_model=D)
    cost = pl.CostEstimate(flops=2 * n_elems, transcendentals=0,
                           bytes_accessed=n_elems * (in_isz + out_isz + 4) + S * D * 4)
    out2 = pl.pallas_call(
        kernel, out_shape=out_shape,
        grid_spec=pltpu.PrefetchScalarGridSpec(
            num_scalar_prefetch=0, grid=grid,
            in_specs=[pl.BlockSpec((tile_s, lane_w), lambda i, j: (i, j)),
                      pl.BlockSpec((tile_s, D), lambda i, j: (i, 0)),
                      pl.BlockSpec((tile_s, lane_w), lambda i, j: (i, j))],
            out_specs=pl.BlockSpec((tile_s, lane_w), lambda i, j: (i, j))),
        compiler_params=compiler_params, cost_estimate=cost,
    )(x2, pe2, mask)
    return out2.reshape(S, B, D)


if __name__ == "__main__":
    # Small shapes from the forward: [seq_len, batch, d_model].  d_model=128
    # keeps the flattened [S, B*D] slab lane-dense (B*D >= 128).
    seq_len, batch, d_model = 8, 2, 128
    max_len = 64
    dropout_p = 0.1

    key = jax.random.PRNGKey(0)
    x = jax.random.normal(key, (seq_len, batch, d_model), dtype=jnp.float32)
    pe = make_positional_encoding(d_model, max_len=max_len)

    # Eval mode (dropout = identity): exact check vs plain JAX reference.
    out_eval = positional_encoding_forward(x, pe, dropout_p=dropout_p, training=False)
    out_eval = jax.block_until_ready(out_eval)
    ref_add = x + pe[:seq_len]
    assert out_eval.shape == x.shape and out_eval.dtype == x.dtype
    assert jnp.allclose(out_eval, ref_add, atol=1e-6), "eval-mode mismatch"

    # Train mode (dropout via in-kernel hardware PRNG on a native TPU backend).
    out_train = positional_encoding_forward(x, pe, dropout_p=dropout_p,
                                            training=True, seed=1234)
    out_train = jax.block_until_ready(out_train)
    assert out_train.shape == x.shape and out_train.dtype == x.dtype

    # Semantics: every element is either dropped (0) or scaled by 1/keep_prob.
    scaled = ref_add / (1.0 - dropout_p)
    is_zero = jnp.isclose(out_train, 0.0, atol=1e-6)
    is_scaled = jnp.isclose(out_train, scaled, rtol=1e-5, atol=1e-5)
    assert bool(jnp.all(is_zero | is_scaled)), "train-mode dropout semantics mismatch"

    print("KERNEL_OK")
</pallas_src>

<mosaic_0001>
module attributes {stable_mosaic.version = 11 : i64} {
  func.func @_pe_add_kernel(%arg0: i32, %arg1: i32, %arg2: memref<8x256xf32, #tpu.memory_space<vmem>>, %arg3: memref<8x128xf32, #tpu.memory_space<vmem>>, %arg4: memref<8x256xf32, #tpu.memory_space<vmem>>) attributes {dimension_semantics = [#tpu.dimension_semantics<parallel>, #tpu.dimension_semantics<parallel>], iteration_bounds = array<i64: 1, 1>, scalar_prefetch = 0 : i64, scratch_operands = 0 : i64, tpu.core_type = #tpu.core_type<tc>, window_params = [{transform_indices = @transform_0, window_bounds = array<i64: 8, 256>}, {transform_indices = @transform_1, window_bounds = array<i64: 8, 128>}, {transform_indices = @transform_2, window_bounds = array<i64: 8, 256>}]} {
    %c0 = arith.constant 0 : index
    %c0_0 = arith.constant 0 : index
    %0 = vector.load %arg3[%c0, %c0_0] : memref<8x128xf32, #tpu.memory_space<vmem>>, vector<8x128xf32>
    %c0_1 = arith.constant 0 : index
    %c0_2 = arith.constant 0 : index
    %1 = vector.load %arg2[%c0_1, %c0_2] : memref<8x256xf32, #tpu.memory_space<vmem>>, vector<8x128xf32>
    %2 = arith.addf %1, %0 : vector<8x128xf32>
    %c0_3 = arith.constant 0 : index
    %c0_4 = arith.constant 0 : index
    %3 = vector.load %arg4[%c0_3, %c0_4] : memref<8x256xf32, #tpu.memory_space<vmem>>, vector<8x128xf32>
    tpu.vector_store %arg4[%c0_3, %c0_4], %2 {strides = array<i32>} : memref<8x256xf32, #tpu.memory_space<vmem>>, vector<8x128xf32>,
    %c0_5 = arith.constant 0 : index
    %c128 = arith.constant 128 : index
    %4 = vector.load %arg2[%c0_5, %c128] : memref<8x256xf32, #tpu.memory_space<vmem>>, vector<8x128xf32>
    %5 = arith.addf %4, %0 : vector<8x128xf32>
    %c0_6 = arith.constant 0 : index
    %c128_7 = arith.constant 128 : index
    %6 = vector.load %arg4[%c0_6, %c128_7] : memref<8x256xf32, #tpu.memory_space<vmem>>, vector<8x128xf32>
    tpu.vector_store %arg4[%c0_6, %c128_7], %5 {strides = array<i32>} : memref<8x256xf32, #tpu.memory_space<vmem>>, vector<8x128xf32>,
    return
  }
  func.func @transform_0(%arg0: i32, %arg1: i32) -> (i32, i32) {
    %c0_i32 = arith.constant 0 : i32
    return %arg0, %arg1 : i32, i32
  }
  func.func @transform_1(%arg0: i32, %arg1: i32) -> (i32, i32) {
    %c0_i32 = arith.constant 0 : i32
    %c0_i32_0 = arith.constant 0 : i32
    return %arg0, %c0_i32 : i32, i32
  }
  func.func @transform_2(%arg0: i32, %arg1: i32) -> (i32, i32) {
    %c0_i32 = arith.constant 0 : i32
    return %arg0, %arg1 : i32, i32
  }
}

</mosaic_0001>

<llo_original>
// kernel: tpu_custom_call.1
$region0: #{tpu_custom_call.1}
  #allocation0 [shape = 'u32[]', space=smem, size = 0x4, offset = 0x4, fixed_abs, tag = 'smem constant byte address 0x4 - core index']
  #allocation1 [shape = 'u32[144,128]{1,0:T(1,128)}', space=vmem, size = 0x12000, scoped, tag = 'internal scratch']
  %s0 = inlined_call_operand.hbm [shape: f32[8,256], index: 0, kind: input, shape index: {}]
  %s1 = inlined_call_operand.hbm [shape: f32[8,128], index: 1, kind: input, shape index: {}]
  %s2 = inlined_call_operand.hbm [shape: f32[8,256], index: 2, kind: output, shape index: {}]
  %s3 = sld [smem:[#allocation0]]
  $region26: #{tpu_custom_call.1} parent=0
    _
  %s5 = ssub.s32 1, %s3
  %s6 = scalar_select 0, %s5, %s3
  $region1: #{tpu_custom_call.1} parent=0
    #allocation2 [shape = 'u8[8192]{0}', space=vmem, size = 0x2000, scoped, tag = 'input window, operand 0, single buffered']
    #allocation3 [shape = 's32[1]{0}', space=sflag, size = 0x4, scoped, tag = 'scoped memory for tpu_custom_call.1']
    #allocation4 [shape = 's32[1]{0}', space=sflag, size = 0x4, scoped, tag = 'scoped memory for tpu_custom_call.1']
    #allocation5 [shape = 'u8[4096]{0}', space=vmem, size = 0x1000, scoped, tag = 'input window, operand 1, single buffered']
    #allocation6 [shape = 's32[1]{0}', space=sflag, size = 0x4, scoped, tag = 'scoped memory for tpu_custom_call.1']
    #allocation7 [shape = 'u8[8192]{0}', space=vmem, size = 0x2000, scoped, tag = 'output window, operand 0, single buffered']
    %7 = vsyncpa [#allocation3], 0
    %8 = vsyncpa [#allocation6], 0
    %9 = vsyncpa [#allocation4], 0
    // Predicated region
    $region2: #{tpu_custom_call.1} parent=1 // pred_check
      _
    $region3: #{tpu_custom_call.1} parent=1 // pred_check_branch
      %11 = sbr.rel (0) target = $region5
    $region4: #{tpu_custom_call.1} parent=1 // pred_region
      %s13 = ssub.s32 256, 256
      %14 = vsyncadd [#allocation3], %s13
      %s16 = sshll.u32 [#allocation2], 4
      %s17 = int_to_ptr.vmem [resolvable:$true] %s16
      %19 = dma.hbm_to_vmem [thread:$0]  %s0, 256, %s17, [#allocation3]
    $region5: #{tpu_custom_call.1} parent=1 // pred_fallthru
      _
    // Predicated region
    $region6: #{tpu_custom_call.1} parent=1 // pred_check
      _
    $region7: #{tpu_custom_call.1} parent=1 // pred_check_branch
      %21 = sbr.rel (0) target = $region9
    $region8: #{tpu_custom_call.1} parent=1 // pred_region
      %s23 = ssub.s32 128, 128
      %24 = vsyncadd [#allocation6], %s23
      %s26 = sshll.u32 [#allocation5], 4
      %s27 = int_to_ptr.vmem [resolvable:$true] %s26
      %29 = dma.hbm_to_vmem [thread:$0]  %s1, 128, %s27, [#allocation6]
    $region9: #{tpu_custom_call.1} parent=1 // pred_fallthru
      _
    // Predicated region
    $region10: #{tpu_custom_call.1} parent=1 // pred_check
      _
    $region11: #{tpu_custom_call.1} parent=1 // pred_check_branch
      %31 = sbr.rel (0) target = $region13
    $region12: #{tpu_custom_call.1} parent=1 // pred_region
      %32 = dma.done [#allocation3], 256
    $region13: #{tpu_custom_call.1} parent=1 // pred_fallthru
      _
    // Predicated region
    $region14: #{tpu_custom_call.1} parent=1 // pred_check
      _
    $region15: #{tpu_custom_call.1} parent=1 // pred_check_branch
      %34 = sbr.rel (0) target = $region17
    $region16: #{tpu_custom_call.1} parent=1 // pred_region
      %35 = dma.done [#allocation6], 128
    $region17: #{tpu_custom_call.1} parent=1 // pred_fallthru
      _
    %v36 = vld [vmem:[#allocation5] sm:$0xff]
    %v37 = vld [vmem:[#allocation2] sm:$0xff]
    %v38 = vadd.f32 %v37, %v36
    %39 = vst [vmem:[#allocation7] sm:$0xff] %v38
    %v40 = vld [vmem:[#allocation2 + $0x8] sm:$0xff]
    %v41 = vadd.f32 %v40, %v36
    %42 = vst [vmem:[#allocation7 + $0x8] sm:$0xff] %v41
    // Predicated region
    $region18: #{tpu_custom_call.1} parent=1 // pred_check
      _
    $region19: #{tpu_custom_call.1} parent=1 // pred_check_branch
      %44 = sbr.rel (0) target = $region21
    $region20: #{tpu_custom_call.1} parent=1 // pred_region
      %s46 = ssub.s32 256, 256
      %47 = vsyncadd [#allocation4], %s46
      %s49 = sshll.u32 [#allocation7], 4
      %s50 = int_to_ptr.vmem [resolvable:$true] %s49
      %52 = dma.vmem_to_hbm [thread:$0]  %s50, 256, %s2, [#allocation4]
    $region21: #{tpu_custom_call.1} parent=1 // pred_fallthru
      _
    // Predicated region
    $region22: #{tpu_custom_call.1} parent=1 // pred_check
      _
    $region23: #{tpu_custom_call.1} parent=1 // pred_check_branch
      %54 = sbr.rel (0) target = $region25
    $region24: #{tpu_custom_call.1} parent=1 // pred_region
      %55 = dma.done [#allocation4], 256
    $region25: #{tpu_custom_call.1} parent=1 // pred_fallthru
      _
    %56 = vsyncpa [#allocation3], 1
    %57 = vsyncpa [#allocation6], 1
    %58 = vsyncpa [#allocation4], 1

</llo_original>
